<compile_context>
chip_gen: v5e
topology: v5e:2x2
jax: 0.10.0
libtpu: 0.0.40
codegen_flags: <defaults>
</compile_context>

<pallas_src>
from typing import NamedTuple

import jax
import jax.numpy as jnp
from jax.experimental import pallas as pl
from jax.experimental.pallas import tpu as pltpu

_LANES = 128
_SUBLANES = 8


def _round_up(x, m):
    return (x + m - 1) // m * m


def _vmem_capacity_bytes():
    try:
        return int(pltpu.get_tpu_info().vmem_capacity_bytes)
    except Exception:
        return 64 << 20  # conservative fallback (v7x per-TC VMEM)


def _mlp2_kernel(x_ref, w1_ref, b1_ref, w2_ref, b2_ref, o_ref, acc_ref):
    j = pl.program_id(1)

    @pl.when(j == 0)
    def _init():
        acc_ref[...] = jnp.zeros_like(acc_ref)

    # lin1 (MXU, f32 accumulation). x is cast to the compute/weight dtype here,
    # in-kernel, so the wrapper never pays an extra HBM cast pass over x.
    x = x_ref[...].astype(w1_ref.dtype)
    h = jnp.dot(x, w1_ref[...], preferred_element_type=jnp.float32)
    # f32 epilogue: bias + ReLU (v5e VPU/EUP have no bf16).
    h = jnp.maximum(h + b1_ref[...], 0.0)
    # dropout (inference / training=False): identity.
    # lin2: deliberate downcast of the activation to the compute dtype for the
    # MXU (bf16 path); accumulation stays f32 in the scratch accumulator.
    acc_ref[...] += jnp.dot(h.astype(w2_ref.dtype), w2_ref[...],
                            preferred_element_type=jnp.float32)

    @pl.when(j == pl.num_programs(1) - 1)
    def _finalize():
        o_ref[...] = (acc_ref[...] + b2_ref[...]).astype(o_ref.dtype)


class MLP2Params(NamedTuple):
    w1: jax.Array   # [c_in, c_hid_p]   compute dtype
    b1: jax.Array   # [1, c_hid_p]      float32
    w2: jax.Array   # [c_hid_p, c_out]  compute dtype
    b2: jax.Array   # [1, c_out]        float32
    tile_h: int     # hidden-dim tile (== c_hid_p when weights are fully resident)


def prepare_params(w1, b1, w2, b2, *, compute_dtype=None):
    """One-time pad + cast of weights/biases (hoisted out of the forward call).

    w1: [c_in, c_hid] (transposed torch Linear weight), b1: [c_hid] or [1, c_hid]
    w2: [c_hid, c_out],                                 b2: [c_out] or [1, c_out]
    """
    c_in, c_hid = w1.shape
    c_hid2, c_out = w2.shape
    assert c_hid2 == c_hid
    cdt = jnp.dtype(compute_dtype) if compute_dtype is not None else jnp.dtype(w1.dtype)
    isz = cdt.itemsize

    # Weight-residency guard: keep both weight matrices VMEM-resident when they
    # fit ~1/3 of VMEM capacity (leaves room for x/out tiles, intermediates and
    # double-buffering); otherwise tile the hidden dim (second grid axis).
    budget = _vmem_capacity_bytes() // 3
    c_in_v = _round_up(c_in, _SUBLANES)
    c_out_v = _round_up(c_out, _LANES)
    resident_bytes = (c_in_v * _round_up(c_hid, _LANES)
                      + _round_up(c_hid, _SUBLANES) * c_out_v) * isz
    if resident_bytes <= budget:
        tile_h = c_hid
        c_hid_p = c_hid
    else:
        per_h_bytes = (c_in_v + c_out_v) * isz          # w1 column + w2 row
        tile_h = max(_LANES, (budget // (2 * per_h_bytes)) // _LANES * _LANES)
        tile_h = min(tile_h, _round_up(c_hid, _LANES))
        c_hid_p = _round_up(c_hid, tile_h)

    pad_h = c_hid_p - c_hid
    w1p = jnp.pad(w1, ((0, 0), (0, pad_h))).astype(cdt)
    w2p = jnp.pad(w2, ((0, pad_h), (0, 0))).astype(cdt)
    b1p = jnp.pad(jnp.reshape(b1, (1, c_hid)), ((0, 0), (0, pad_h))).astype(jnp.float32)
    b2p = jnp.reshape(b2, (1, c_out)).astype(jnp.float32)
    return MLP2Params(w1p, b1p, w2p, b2p, int(tile_h))


def mlp2_forward(x, params, *, tile_n=1024):
    """Fused MLP2 forward. x: [N, C_in] -> [N, C_out] in x.dtype."""
    w1p, b1p, w2p, b2p, tile_h = params
    n, c_in = x.shape
    assert c_in == w1p.shape[0]
    c_hid_p = w1p.shape[1]
    c_out = w2p.shape[1]
    h_tiles = c_hid_p // tile_h
    out_dtype = x.dtype
    cdt = w1p.dtype

    # Row tiling: multiple of 8 sublanes; keep >= 2 row tiles when possible so
    # the "parallel" row axis can be split across both v7x TensorCores.
    if n <= _SUBLANES:
        tile_n = n
    else:
        tile_n = _round_up(min(tile_n, n), _SUBLANES)
        tile_n = min(tile_n, _round_up(pl.cdiv(n, 2), _SUBLANES))
    n_tiles = pl.cdiv(n, tile_n)

    # VMEM accounting (lane/sublane-padded) -> scoped limit, capped at ~75% of
    # physical capacity (96 MiB on v5e/v6e, 48 MiB on v7x).
    isz = jnp.dtype(cdt).itemsize
    xsz = jnp.dtype(x.dtype).itemsize
    osz = jnp.dtype(out_dtype).itemsize
    c_in_v = _round_up(c_in, _LANES)
    c_out_v = _round_up(c_out, _LANES)
    tile_h_v = _round_up(tile_h, _LANES)
    vmem_needed = (
        2 * tile_n * c_in_v * xsz                               # x tiles (double-buffered)
        + 2 * tile_n * c_out_v * osz                            # out tiles
        + 2 * (_round_up(c_in, _SUBLANES) * tile_h_v
               + _round_up(tile_h, _SUBLANES) * c_out_v) * isz  # weight tiles
        + 2 * _SUBLANES * (tile_h_v + c_out_v) * 4              # biases
        + tile_n * (tile_h_v + c_out_v) * 4                     # h intermediate + acc scratch
    )
    vmem_cap = _vmem_capacity_bytes()
    vmem_limit = int(min(max(2 * vmem_needed, 32 << 20), (vmem_cap * 3) // 4))

    flops = 2 * n * (c_in * c_hid_p + c_hid_p * c_out)
    bytes_accessed = (n * c_in * xsz
                      + (c_in * c_hid_p + c_hid_p * c_out) * isz
                      + (c_hid_p + c_out) * 4
                      + n * c_out * osz)

    return pl.pallas_call(
        _mlp2_kernel,
        out_shape=jax.ShapeDtypeStruct((n, c_out), out_dtype),
        grid=(n_tiles, h_tiles),
        in_specs=[
            pl.BlockSpec((tile_n, c_in), lambda i, j: (i, 0)),      # x (row-tiled)
            pl.BlockSpec((c_in, tile_h), lambda i, j: (0, j)),      # w1 (resident if h_tiles==1)
            pl.BlockSpec((1, tile_h), lambda i, j: (0, j)),         # b1
            pl.BlockSpec((tile_h, c_out), lambda i, j: (j, 0)),     # w2
            pl.BlockSpec((1, c_out), lambda i, j: (0, 0)),          # b2
        ],
        out_specs=pl.BlockSpec((tile_n, c_out), lambda i, j: (i, 0)),
        scratch_shapes=[pltpu.VMEM((tile_n, c_out), jnp.float32)],   # f32 accumulator
        compiler_params=pltpu.CompilerParams(
            dimension_semantics=("parallel", "arbitrary"),
            vmem_limit_bytes=vmem_limit,
        ),
        cost_estimate=pl.CostEstimate(
            flops=int(flops), transcendentals=0,
            bytes_accessed=int(bytes_accessed)),
    )(x, w1p, b1p, w2p, b2p)


def init_params(key, in_channels, out_channels, num_hid):
    """Deterministic parameter init (Kaiming-uniform-ish, like torch Linear)."""
    k1, k2, k3, k4 = jax.random.split(key, 4)
    bound1 = 1.0 / jnp.sqrt(in_channels)
    bound2 = 1.0 / jnp.sqrt(num_hid)
    # Stored already transposed to [in, out] for the kernel (x @ W + b).
    w1 = jax.random.uniform(k1, (in_channels, num_hid), jnp.float32, -bound1, bound1)
    b1 = jax.random.uniform(k2, (1, num_hid), jnp.float32, -bound1, bound1)
    w2 = jax.random.uniform(k3, (num_hid, out_channels), jnp.float32, -bound2, bound2)
    b2 = jax.random.uniform(k4, (1, out_channels), jnp.float32, -bound2, bound2)
    return w1, b1, w2, b2


if __name__ == "__main__":
    key = jax.random.PRNGKey(0)
    kx, kp, kx2, kx3 = jax.random.split(key, 4)

    # Small shapes consistent with the module: N nodes, feature dims 4 -> 16 -> 4.
    N, IN_CH, NUM_HID, OUT_CH = 8, 4, 16, 4

    x = jax.random.normal(kx, (N, IN_CH), jnp.float32)
    w1, b1, w2, b2 = init_params(kp, IN_CH, OUT_CH, NUM_HID)
    ref_fn = lambda xx: jnp.maximum(xx @ w1 + b1, 0.0) @ w2 + b2

    # --- small f32 run (single grid point), exact check vs pure-JAX reference ---
    params_f32 = prepare_params(w1, b1, w2, b2)
    out = jax.block_until_ready(mlp2_forward(x, params_f32))
    assert out.shape == (N, OUT_CH)
    assert jnp.allclose(out, ref_fn(x), atol=1e-5, rtol=1e-5)

    # --- ragged row grid (N not a multiple of the tile), f32 exact check ---
    N3 = 200
    x3 = jax.random.normal(kx3, (N3, IN_CH), jnp.float32)
    out3 = jax.block_until_ready(mlp2_forward(x3, params_f32, tile_n=64))
    assert out3.shape == (N3, OUT_CH)
    assert jnp.allclose(out3, ref_fn(x3), atol=1e-5, rtol=1e-5)

    # --- larger run exercising the row grid (2 tiles -> both v7x cores) + bf16 MXU path ---
    N2 = 1024
    x2 = jax.random.normal(kx2, (N2, IN_CH), jnp.float32)
    params_bf16 = prepare_params(w1, b1, w2, b2, compute_dtype=jnp.bfloat16)
    out2 = jax.block_until_ready(mlp2_forward(x2, params_bf16))

    # Reference mimicking the in-kernel bf16 casts (x, weights, and the hidden
    # activation fed to the second matmul), with f32 accumulation.
    xb = x2.astype(jnp.bfloat16).astype(jnp.float32)
    w1b = w1.astype(jnp.bfloat16).astype(jnp.float32)
    w2b = w2.astype(jnp.bfloat16).astype(jnp.float32)
    h_ref = jnp.maximum(xb @ w1b + b1, 0.0).astype(jnp.bfloat16).astype(jnp.float32)
    ref2 = h_ref @ w2b + b2
    assert out2.shape == (N2, OUT_CH)
    assert jnp.allclose(out2, ref2, atol=3e-2, rtol=3e-2)

    print("KERNEL_OK")
</pallas_src>

<mosaic_0001>
module attributes {stable_mosaic.version = 11 : i64} {
  func.func @_mlp2_kernel(%arg0: i32, %arg1: i32, %arg2: memref<8x4xf32, #tpu.memory_space<vmem>>, %arg3: memref<4x16xf32, #tpu.memory_space<vmem>>, %arg4: memref<1x16xf32, #tpu.memory_space<vmem>>, %arg5: memref<16x4xf32, #tpu.memory_space<vmem>>, %arg6: memref<1x4xf32, #tpu.memory_space<vmem>>, %arg7: memref<8x4xf32, #tpu.memory_space<vmem>>, %arg8: memref<8x4xf32, #tpu.memory_space<vmem>>) attributes {dimension_semantics = [#tpu.dimension_semantics<parallel>, #tpu.dimension_semantics<arbitrary>], iteration_bounds = array<i64: 1, 1>, scalar_prefetch = 0 : i64, scratch_operands = 1 : i64, tpu.core_type = #tpu.core_type<tc>, window_params = [{transform_indices = @transform_0, window_bounds = array<i64: 8, 4>}, {transform_indices = @transform_1, window_bounds = array<i64: 4, 16>}, {transform_indices = @transform_2, window_bounds = array<i64: 1, 16>}, {transform_indices = @transform_3, window_bounds = array<i64: 16, 4>}, {pipeline_mode = #tpu.pipeline_mode<synchronous>, transform_indices = @transform_4, window_bounds = array<i64: 1, 4>}, {transform_indices = @transform_5, window_bounds = array<i64: 8, 4>}]} {
    %c0_i32 = arith.constant 0 : i32
    %0 = arith.cmpi eq, %arg1, %c0_i32 : i32
    %1 = arith.extui %0 : i1 to i32
    %c0_i32_0 = arith.constant 0 : i32
    %2 = arith.cmpi ne, %1, %c0_i32_0 : i32
    scf.if %2 {
      %cst_16 = arith.constant 0.000000e+00 : f32
      %19 = vector.broadcast %cst_16 : f32 to vector<8x4xf32>
      %c0_17 = arith.constant 0 : index
      %c0_18 = arith.constant 0 : index
      %20 = vector.load %arg8[%c0_17, %c0_18] : memref<8x4xf32, #tpu.memory_space<vmem>>, vector<8x4xf32>
      tpu.vector_store %arg8[%c0_17, %c0_18], %19 {strides = array<i32>} : memref<8x4xf32, #tpu.memory_space<vmem>>, vector<8x4xf32>,
    } else {
    }
    %c0 = arith.constant 0 : index
    %c0_1 = arith.constant 0 : index
    %3 = vector.load %arg2[%c0, %c0_1] : memref<8x4xf32, #tpu.memory_space<vmem>>, vector<8x4xf32>
    %c0_2 = arith.constant 0 : index
    %c0_3 = arith.constant 0 : index
    %4 = vector.load %arg3[%c0_2, %c0_3] : memref<4x16xf32, #tpu.memory_space<vmem>>, vector<4x16xf32>
    %cst = arith.constant dense<0.000000e+00> : vector<8x16xf32>
    %5 = tpu.matmul %3, %4, %cst {dimension_numbers = #tpu.dot_dimension_numbers<[1], [0], [0], [1], [0, 0, 1, 1], [], []>} : vector<8x4xf32>, vector<4x16xf32>, vector<8x16xf32> -> vector<8x16xf32>
    %c0_4 = arith.constant 0 : index
    %c0_5 = arith.constant 0 : index
    %6 = vector.load %arg4[%c0_4, %c0_5] : memref<1x16xf32, #tpu.memory_space<vmem>>, vector<1x16xf32>
    %7 = vector.broadcast %6 : vector<1x16xf32> to vector<8x16xf32>
    %8 = arith.addf %5, %7 : vector<8x16xf32>
    %cst_6 = arith.constant 0.000000e+00 : f32
    %9 = vector.broadcast %cst_6 : f32 to vector<8x16xf32>
    %10 = arith.maximumf %8, %9 : vector<8x16xf32>
    %c0_7 = arith.constant 0 : index
    %c0_8 = arith.constant 0 : index
    %11 = vector.load %arg8[%c0_7, %c0_8] : memref<8x4xf32, #tpu.memory_space<vmem>>, vector<8x4xf32>
    %c0_9 = arith.constant 0 : index
    %c0_10 = arith.constant 0 : index
    %12 = vector.load %arg5[%c0_9, %c0_10] : memref<16x4xf32, #tpu.memory_space<vmem>>, vector<16x4xf32>
    %cst_11 = arith.constant dense<0.000000e+00> : vector<8x4xf32>
    %13 = tpu.matmul %10, %12, %cst_11 {dimension_numbers = #tpu.dot_dimension_numbers<[1], [0], [0], [1], [0, 0, 1, 1], [], []>} : vector<8x16xf32>, vector<16x4xf32>, vector<8x4xf32> -> vector<8x4xf32>
    %14 = arith.addf %11, %13 : vector<8x4xf32>
    %c0_12 = arith.constant 0 : index
    %c0_13 = arith.constant 0 : index
    %15 = vector.load %arg8[%c0_12, %c0_13] : memref<8x4xf32, #tpu.memory_space<vmem>>, vector<8x4xf32>
    tpu.vector_store %arg8[%c0_12, %c0_13], %14 {strides = array<i32>} : memref<8x4xf32, #tpu.memory_space<vmem>>, vector<8x4xf32>,
    %c0_i32_14 = arith.constant 0 : i32
    %16 = arith.cmpi eq, %arg1, %c0_i32_14 : i32
    %17 = arith.extui %16 : i1 to i32
    %c0_i32_15 = arith.constant 0 : i32
    %18 = arith.cmpi ne, %17, %c0_i32_15 : i32
    scf.if %18 {
      %c0_16 = arith.constant 0 : index
      %c0_17 = arith.constant 0 : index
      %19 = vector.load %arg8[%c0_16, %c0_17] : memref<8x4xf32, #tpu.memory_space<vmem>>, vector<8x4xf32>
      %c0_18 = arith.constant 0 : index
      %c0_19 = arith.constant 0 : index
      %20 = vector.load %arg6[%c0_18, %c0_19] : memref<1x4xf32, #tpu.memory_space<vmem>>, vector<1x4xf32>
      %21 = vector.broadcast %20 : vector<1x4xf32> to vector<8x4xf32>
      %22 = arith.addf %19, %21 : vector<8x4xf32>
      %c0_20 = arith.constant 0 : index
      %c0_21 = arith.constant 0 : index
      %23 = vector.load %arg7[%c0_20, %c0_21] : memref<8x4xf32, #tpu.memory_space<vmem>>, vector<8x4xf32>
      tpu.vector_store %arg7[%c0_20, %c0_21], %22 {strides = array<i32>} : memref<8x4xf32, #tpu.memory_space<vmem>>, vector<8x4xf32>,
    } else {
    }
    return
  }
  func.func @transform_0(%arg0: i32, %arg1: i32) -> (i32, i32) {
    %c0_i32 = arith.constant 0 : i32
    %c0_i32_0 = arith.constant 0 : i32
    return %arg0, %c0_i32 : i32, i32
  }
  func.func @transform_1(%arg0: i32, %arg1: i32) -> (i32, i32) {
    %c0_i32 = arith.constant 0 : i32
    %c0_i32_0 = arith.constant 0 : i32
    return %c0_i32, %arg1 : i32, i32
  }
  func.func @transform_2(%arg0: i32, %arg1: i32) -> (i32, i32) {
    %c0_i32 = arith.constant 0 : i32
    %c0_i32_0 = arith.constant 0 : i32
    return %c0_i32, %arg1 : i32, i32
  }
  func.func @transform_3(%arg0: i32, %arg1: i32) -> (i32, i32) {
    %c0_i32 = arith.constant 0 : i32
    %c0_i32_0 = arith.constant 0 : i32
    return %arg1, %c0_i32 : i32, i32
  }
  func.func @transform_4(%arg0: i32, %arg1: i32) -> (i32, i32) {
    %c0_i32 = arith.constant 0 : i32
    %c0_i32_0 = arith.constant 0 : i32
    %c0_i32_1 = arith.constant 0 : i32
    return %c0_i32, %c0_i32_0 : i32, i32
  }
  func.func @transform_5(%arg0: i32, %arg1: i32) -> (i32, i32) {
    %c0_i32 = arith.constant 0 : i32
    %c0_i32_0 = arith.constant 0 : i32
    return %arg0, %c0_i32 : i32, i32
  }
}

</mosaic_0001>

<llo_original>
// kernel: tpu_custom_call.1
$region0: #{tpu_custom_call.1}
  #allocation0 [shape = 'u32[]', space=smem, size = 0x4, offset = 0x4, fixed_abs, tag = 'smem constant byte address 0x4 - core index']
  #allocation1 [shape = 'u32[72,128]{1,0:T(1,128)}', space=vmem, size = 0x9000, scoped, tag = 'internal scratch']
  #allocation2 [shape = 'f32[8,4]{1,0:T(8,128)}', space=vmem, size = 0x1000, scoped, tag = 'scratch operand']
  %s0 = inlined_call_operand.vmem [shape: f32[8,4], index: 0, kind: input, shape index: {}]
  %s1 = inlined_call_operand.vmem [shape: f32[4,16], index: 1, kind: input, shape index: {}]
  %s2 = inlined_call_operand.vmem [shape: f32[1,16], index: 2, kind: input, shape index: {}]
  %s3 = inlined_call_operand.vmem [shape: f32[16,4], index: 3, kind: input, shape index: {}]
  %s4 = inlined_call_operand.vmem [shape: f32[1,4], index: 4, kind: input, shape index: {}]
  %s5 = inlined_call_operand.vmem [shape: f32[8,4], index: 5, kind: output, shape index: {}]
  %s6 = sld [smem:[#allocation0]]
  $region38: #{tpu_custom_call.1} parent=0
    _
  %s8 = ssub.s32 1, %s6
  %s9 = scalar_select 0, %s8, %s6
  // Predicated region
  $region2: #{tpu_custom_call.1} parent=0 // pred_check
    _
  $region3: #{tpu_custom_call.1} parent=0 // pred_check_branch
    %11 = sbr.rel (0) target = $region5
  $region4: #{tpu_custom_call.1} parent=0 // pred_region
    _
  $region5: #{tpu_custom_call.1} parent=0 // pred_fallthru
    _
  // Predicated region
  $region6: #{tpu_custom_call.1} parent=0 // pred_check
    _
  $region7: #{tpu_custom_call.1} parent=0 // pred_check_branch
    %13 = sbr.rel (0) target = $region9
  $region8: #{tpu_custom_call.1} parent=0 // pred_region
    _
  $region9: #{tpu_custom_call.1} parent=0 // pred_fallthru
    _
  // Predicated region
  $region10: #{tpu_custom_call.1} parent=0 // pred_check
    _
  $region11: #{tpu_custom_call.1} parent=0 // pred_check_branch
    %15 = sbr.rel (0) target = $region13
  $region12: #{tpu_custom_call.1} parent=0 // pred_region
    _
  $region13: #{tpu_custom_call.1} parent=0 // pred_fallthru
    _
  // Predicated region
  $region14: #{tpu_custom_call.1} parent=0 // pred_check
    _
  $region15: #{tpu_custom_call.1} parent=0 // pred_check_branch
    %17 = sbr.rel (0) target = $region17
  $region16: #{tpu_custom_call.1} parent=0 // pred_region
    _
  $region17: #{tpu_custom_call.1} parent=0 // pred_fallthru
    _
  // Predicated region
  $region18: #{tpu_custom_call.1} parent=0 // pred_check
    _
  $region19: #{tpu_custom_call.1} parent=0 // pred_check_branch
    %19 = sbr.rel (0) target = $region21
  $region20: #{tpu_custom_call.1} parent=0 // pred_region
    _
  $region21: #{tpu_custom_call.1} parent=0 // pred_fallthru
    _
  %p20 = scmp.eq.s32.totalorder 0, 0
  // Predicated region
  $region22: #{tpu_custom_call.1} parent=0 // pred_check
    %p21 = pneg %p20
  $region23: #{tpu_custom_call.1} parent=0 // pred_check_branch
    %23 = sbr.rel (%p21) target = $region25
  $region24: #{tpu_custom_call.1} parent=0 // pred_region
    %vm24 = vcmask 31744
    %25 = vst.msk [vmem:[#allocation2] sm:$0xff] %vm24, 0.0
  $region25: #{tpu_custom_call.1} parent=0 // pred_fallthru
    _
  %v26 = vld [vmem:[%s0] sm:$0xff]
  %v27 = vld [vmem:[%s1] sm:$0xf]
  %v28 = vld [vmem:[%s2] sm:$0x1]
  %v30 = vperm.slane %v28, 0
  %vm32 = vcmask 31744
  %v34 = vsel %vm32, %v26, 0
  %vm36 = vcmask 1043456
  %v38 = vsel %vm36, %v27, 0
  %40 = vmatpush.msra.mxu0 0.0
  %41 = vmatpush.msra.mxu0 0.0
  %42 = vmatpush.msra.mxu0 0.0
  %43 = vmatpush.msra.mxu0 0.0
  %44 = vmatpush.msra.mxu0 0.0
  %45 = vmatpush.msra.mxu0 0.0
  %46 = vmatpush.msra.mxu0 0.0
  %47 = vmatpush.msra.mxu0 0.0
  %48 = vmatpush.msra.mxu0 0.0
  %49 = vmatpush.msra.mxu0 0.0
  %50 = vmatpush.msra.mxu0 0.0
  %51 = vmatpush.msra.mxu0 0.0
  %52 = vmatpush.msra.mxu0 0.0
  %53 = vmatpush.msra.mxu0 0.0
  %54 = vmatpush.msra.mxu0 0.0
  %55 = vmatpush.msra.mxu0 %v38
  %56 = vmatmul.f32.gmra.mxu0 %v34
  %v57 = vpop.f32.mrf.mxu0
  %v58 = vadd.f32 %v30, %v57
  %59 = vdwg.mxu0
  %v60 = vmax.f32 %v58, 0.0
  %v61 = vld [vmem:[#allocation2] sm:$0xff]
  %v62 = vld [vmem:[%s3] sm:$0xff]
  %v63 = vld [vmem:[%s3 + $0x8] sm:$0xff]
  %vm64 = vcmask 130048
  %v66 = vsel %vm64, %v60, 0
  %68 = vmatpush.msra.mxu0 0.0
  %69 = vmatpush.msra.mxu0 0.0
  %70 = vmatpush.msra.mxu0 0.0
  %71 = vmatpush.msra.mxu0 0.0
  %72 = vmatpush.msra.mxu0 0.0
  %73 = vmatpush.msra.mxu0 0.0
  %74 = vmatpush.msra.mxu0 0.0
  %75 = vmatpush.msra.mxu0 0.0
  %76 = vmatpush.msra.mxu0 0.0
  %77 = vmatpush.msra.mxu0 0.0
  %78 = vmatpush.msra.mxu0 0.0
  %79 = vmatpush.msra.mxu0 0.0
  %80 = vmatpush.msra.mxu0 0.0
  %81 = vmatpush.msra.mxu0 0.0
  %82 = vmatpush.msra.mxu0 %v63
  %83 = vmatpush.msra.mxu0 %v62
  %84 = vmatmul.f32.gmra.mxu0 %v66
  %v85 = vpop.f32.mrf.mxu0
  %v86 = vadd.f32 0.0, %v85
  %87 = vdwg.mxu0
  %v88 = vadd.f32 %v61, %v86
  %89 = vst.msk [vmem:[#allocation2] sm:$0xff] %vm32, %v88
  // Predicated region
  $region26: #{tpu_custom_call.1} parent=0 // pred_check
    %p90 = pneg %p20
  $region27: #{tpu_custom_call.1} parent=0 // pred_check_branch
    %92 = sbr.rel (%p90) target = $region29
  $region28: #{tpu_custom_call.1} parent=0 // pred_region
    %v93 = vld [vmem:[#allocation2] sm:$0xff]
    %v94 = vld [vmem:[%s4] sm:$0x1]
    %v96 = vperm.slane %v94, 0
    %v98 = vadd.f32 %v93, %v96
    %99 = vst.msk [vmem:[%s5] sm:$0xff] %vm32, %v98
  $region29: #{tpu_custom_call.1} parent=0 // pred_fallthru
    _
  // Predicated region
  $region30: #{tpu_custom_call.1} parent=0 // pred_check
    _
  $region31: #{tpu_custom_call.1} parent=0 // pred_check_branch
    %101 = sbr.rel (0) target = $region33
  $region32: #{tpu_custom_call.1} parent=0 // pred_region
    _
  $region33: #{tpu_custom_call.1} parent=0 // pred_fallthru
    _
  // Predicated region
  $region34: #{tpu_custom_call.1} parent=0 // pred_check
    _
  $region35: #{tpu_custom_call.1} parent=0 // pred_check_branch
    %103 = sbr.rel (0) target = $region37
  $region36: #{tpu_custom_call.1} parent=0 // pred_region
    _
  $region37: #{tpu_custom_call.1} parent=0 // pred_fallthru
    _

</llo_original>
